<compile_context>
chip_gen: v5e
topology: v5e:2x2
jax: 0.10.0
libtpu: 0.0.40
codegen_flags: <defaults>
</compile_context>

<pallas_src>
import math
from functools import partial

import jax
import jax.numpy as jnp
from jax.experimental import pallas as pl
from jax.experimental.pallas import tpu as pltpu


# ----------------------------------------------------------------------------
# Fused kernel
# ----------------------------------------------------------------------------

def _fused_kernel(x_ref, adj_ref, ws_ref, bs_ref, out_ref, loss_ref, *,
                  nfeat, h_pad, c_pad, nlayer, k_set, lamda, tau):
    # MXU feeds in bf16; all elementwise / transcendental math stays f32.
    x = x_ref[...].astype(jnp.bfloat16)        # (N, nfeat) bf16
    adj = adj_ref[...]                         # (N, N)     bf16

    # Static slices of the packed slabs (no extra DMAs).
    ew = ws_ref[0:nfeat, 0:h_pad]                            # (nfeat, h_pad)
    w0 = ws_ref[nfeat:nfeat + h_pad, 0:h_pad]                # (h_pad, h_pad)
    w1 = ws_ref[nfeat + h_pad:nfeat + 2 * h_pad, 0:c_pad]    # (h_pad, c_pad)
    eb = bs_ref[0:1, 0:h_pad]                                # f32 biases
    b0 = bs_ref[1:2, 0:h_pad]
    b1 = bs_ref[2:3, 0:c_pad]                                # pad cols = -1e30

    inv_tau = 1.0 / tau

    def bind_loss(z1, z2):
        # F.normalize(z, eps=1e-12): z / max(||z||, 1e-12)
        #   == z * rsqrt(max(||z||^2, 1e-24))   (EUP rsqrt, no divide)
        ss1 = jnp.sum(z1 * z1, axis=1, keepdims=True)
        ss2 = jnp.sum(z2 * z2, axis=1, keepdims=True)
        z1n = z1 * jax.lax.rsqrt(jnp.maximum(ss1, 1e-24))
        z2n = z2 * jax.lax.rsqrt(jnp.maximum(ss2, 1e-24))

        # refl = z1n @ z1n.T, between = z1n @ z2n.T  (kept f32 so the explicit
        # diagonal subtraction below matches exactly; cast to bf16 + stream
        # column blocks when N scales).
        refl = jax.lax.dot_general(z1n, z1n, (((1,), (1,)), ((), ())),
                                   preferred_element_type=jnp.float32)
        betw = jax.lax.dot_general(z1n, z2n, (((1,), (1,)), ((), ())),
                                   preferred_element_type=jnp.float32)

        # Diagonals via explicit row-dots (robust to the 1e-12 norm clamp).
        d_refl = jnp.exp(jnp.sum(z1n * z1n, axis=1, keepdims=True) * inv_tau)
        s_betw = jnp.sum(z1n * z2n, axis=1, keepdims=True) * inv_tau
        d_betw = jnp.exp(s_betw)

        # denom = sum_offdiag(exp(refl/tau)) + sum_offdiag(exp(between/tau))
        denom = (jnp.sum(jnp.exp(refl * inv_tau), axis=1, keepdims=True)
                 + jnp.sum(jnp.exp(betw * inv_tau), axis=1, keepdims=True)
                 - d_refl - d_betw)
        # CT = -log(diag(between)/denom) = log(denom) - sim_diag/tau
        ct = jnp.log(denom) - s_betw
        return jnp.mean(ct, keepdims=True)                       # (1, 1)

    # encoder -> fcs0
    zero = jnp.dot(x, ew, preferred_element_type=jnp.float32) + eb
    layer_inner = jnp.dot(zero.astype(jnp.bfloat16), w0,
                          preferred_element_type=jnp.float32) + b0

    loss = jnp.zeros((1, 1), jnp.float32)
    # TODO(synk): convert to lax.fori_loop + pl.when if nlayer grows beyond 2.
    for i in range(nlayer):
        # Part_GraphConvolution (assumed GCNII-style, parameter free)
        beta = math.log(lamda / (i + 1) + 1.0)
        prop = jnp.dot(adj, layer_inner.astype(jnp.bfloat16),
                       preferred_element_type=jnp.float32)
        current = (1.0 - beta) * prop + beta * layer_inner
        if i in k_set:
            # dropout_c = 0.0 -> F.dropout is identity
            loss = loss + bind_loss(current, layer_inner)
        layer_inner = current

    # fcs1 + log_softmax (padded class columns carry a -1e30 f32 bias so they
    # contribute nothing to the softmax; the wrapper slices them away).
    logits = jnp.dot(layer_inner.astype(jnp.bfloat16), w1,
                     preferred_element_type=jnp.float32) + b1
    m = jnp.max(logits, axis=1, keepdims=True)
    lse = m + jnp.log(jnp.sum(jnp.exp(logits - m), axis=1, keepdims=True))
    out_ref[...] = logits - lse
    loss_ref[0, 0] = loss[0, 0]


# ----------------------------------------------------------------------------
# Wrapper
# ----------------------------------------------------------------------------

def _round_up(v, m):
    return ((v + m - 1) // m) * m


class Args:
    nlayer = 2
    hid = 32
    lamda_c = 0.5
    tau = 0.5
    dropout_c = 0.0   # deterministic: dropout is identity
    k = 1


def make_k_list(args):
    if args.k == 1:
        return [args.k * i for i in range(args.nlayer)]
    ks = []
    for i in range(args.nlayer):
        if args.k ** i < args.nlayer:
            ks.append(args.k ** i)
        else:
            break
    return ks


def init_params(key, nfeat, hid, nclass):
    """nn.Linear-style U(-1/sqrt(fan_in), +1/sqrt(fan_in)) init, W as (in, out)."""
    ks = jax.random.split(key, 6)

    def lin(kw, kb, fan_in, fan_out):
        bound = 1.0 / math.sqrt(fan_in)
        w = jax.random.uniform(kw, (fan_in, fan_out), jnp.float32, -bound, bound)
        b = jax.random.uniform(kb, (1, fan_out), jnp.float32, -bound, bound)
        return w, b

    params = {}
    params["encoder_w"], params["encoder_b"] = lin(ks[0], ks[1], nfeat, hid)
    params["fcs0_w"], params["fcs0_b"] = lin(ks[2], ks[3], hid, hid)
    params["fcs1_w"], params["fcs1_b"] = lin(ks[4], ks[5], hid, nclass)
    return params


def prepare_packed_params(params, adj, nfeat, hid, nclass):
    """One-time padding + packing of operands.  Call OUTSIDE the per-step jit
    so no padding work happens on the forward path (review item #1/#2/#3/#4).
    """
    h_pad = _round_up(hid, 128)
    c_pad = _round_up(nclass, 128)
    lanes = max(h_pad, c_pad)

    # Weight slab (bf16): rows [0:nfeat]=encoder, [nfeat:nfeat+h_pad]=fcs0,
    # [nfeat+h_pad:nfeat+2*h_pad]=fcs1.  Padded rows/cols are zero.
    ws = jnp.zeros((nfeat + 2 * h_pad, lanes), jnp.float32)
    ws = ws.at[0:nfeat, 0:hid].set(params["encoder_w"])
    ws = ws.at[nfeat:nfeat + hid, 0:hid].set(params["fcs0_w"])
    ws = ws.at[nfeat + h_pad:nfeat + h_pad + hid, 0:nclass].set(params["fcs1_w"])
    ws = ws.astype(jnp.bfloat16)

    # Bias slab (f32): row0=eb, row1=b0, row2=b1 (pad cols -1e30 for softmax).
    bs = jnp.zeros((3, lanes), jnp.float32)
    bs = bs.at[0, 0:hid].set(params["encoder_b"][0])
    bs = bs.at[1, 0:hid].set(params["fcs0_b"][0])
    bs = bs.at[2, :].set(-1e30)
    bs = bs.at[2, 0:nclass].set(params["fcs1_b"][0])

    return {"ws": ws, "bs": bs, "adj": adj.astype(jnp.bfloat16)}


def tsc_sgc_p_forward(packed, x, args, nfeat, nclass):
    # x: (1, N, nfeat) -> (N, nfeat)   (torch.squeeze(x, 0))
    x2d = jnp.squeeze(x, axis=0)
    n = x2d.shape[0]
    h_pad = _round_up(args.hid, 128)
    c_pad = _round_up(nclass, 128)

    kernel = partial(_fused_kernel,
                     nfeat=nfeat, h_pad=h_pad, c_pad=c_pad,
                     nlayer=args.nlayer,
                     k_set=frozenset(make_k_list(args)),
                     lamda=args.lamda_c,
                     tau=args.tau)

    vmem = pl.BlockSpec(memory_space=pltpu.MemorySpace.VMEM)
    smem = pl.BlockSpec(memory_space=pltpu.MemorySpace.SMEM)
    log_probs_pad, loss = pl.pallas_call(
        kernel,
        in_specs=[vmem, vmem, vmem, vmem],
        out_specs=(vmem, smem),
        out_shape=(jax.ShapeDtypeStruct((n, c_pad), jnp.float32),
                   jax.ShapeDtypeStruct((1, 1), jnp.float32)),
    )(x2d, packed["adj"], packed["ws"], packed["bs"])

    return log_probs_pad[:, :nclass], loss[0, 0], 0, 0


# ----------------------------------------------------------------------------
# Main
# ----------------------------------------------------------------------------

if __name__ == "__main__":
    args = Args()
    N, NFEAT, NCLASS = 8, 16, 4

    key = jax.random.PRNGKey(0)
    k_par, k_x, k_adj = jax.random.split(key, 3)

    params = init_params(k_par, NFEAT, args.hid, NCLASS)
    x = jax.random.normal(k_x, (1, N, NFEAT), jnp.float32)

    # Symmetric-normalized adjacency D^{-1/2} (A + I) D^{-1/2}
    a = (jax.random.uniform(k_adj, (N, N)) > 0.5).astype(jnp.float32)
    a = jnp.maximum(a, a.T) + jnp.eye(N, dtype=jnp.float32)
    d_inv_sqrt = 1.0 / jnp.sqrt(jnp.sum(a, axis=1))
    adj = a * d_inv_sqrt[:, None] * d_inv_sqrt[None, :]

    # Pad / pack ONCE, outside the jitted forward.
    packed = prepare_packed_params(params, adj, NFEAT, args.hid, NCLASS)

    fwd = jax.jit(lambda pk, xx: tsc_sgc_p_forward(pk, xx, args, NFEAT, NCLASS))
    log_probs, loss, _, _ = fwd(packed, x)
    jax.block_until_ready((log_probs, loss))

    assert log_probs.shape == (N, NCLASS)
    assert jnp.all(jnp.isfinite(log_probs))
    assert jnp.isfinite(loss)
    # log_softmax self-consistency: rows exponentiate to probability 1.
    row_prob = jnp.sum(jnp.exp(log_probs), axis=1)
    assert jnp.allclose(row_prob, 1.0, atol=1e-4), row_prob
    print("KERNEL_OK")
</pallas_src>

<mosaic_0001>
module attributes {stable_mosaic.version = 11 : i64} {
  func.func @_fused_kernel(%arg0: memref<8x16xf32, #tpu.memory_space<vmem>>, %arg1: memref<8x8xbf16, #tpu.memory_space<vmem>>, %arg2: memref<272x128xbf16, #tpu.memory_space<vmem>>, %arg3: memref<3x128xf32, #tpu.memory_space<vmem>>, %arg4: memref<8x128xf32, #tpu.memory_space<vmem>>, %arg5: memref<1x1xf32, #tpu.memory_space<smem>>) attributes {dimension_semantics = [], scalar_prefetch = 0 : i64, scratch_operands = 0 : i64, tpu.core_type = #tpu.core_type<tc>} {
    %c0 = arith.constant 0 : index
    %c0_0 = arith.constant 0 : index
    %0 = vector.load %arg0[%c0, %c0_0] : memref<8x16xf32, #tpu.memory_space<vmem>>, vector<8x16xf32>
    %1 = arith.truncf %0 : vector<8x16xf32> to vector<8x16xbf16>
    %c0_1 = arith.constant 0 : index
    %c0_2 = arith.constant 0 : index
    %2 = vector.load %arg1[%c0_1, %c0_2] : memref<8x8xbf16, #tpu.memory_space<vmem>>, vector<8x8xbf16>
    %c0_3 = arith.constant 0 : index
    %c0_4 = arith.constant 0 : index
    %3 = vector.load %arg2[%c0_3, %c0_4] : memref<272x128xbf16, #tpu.memory_space<vmem>>, vector<16x128xbf16>
    %c16 = arith.constant 16 : index
    %c0_5 = arith.constant 0 : index
    %4 = vector.load %arg2[%c16, %c0_5] : memref<272x128xbf16, #tpu.memory_space<vmem>>, vector<128x128xbf16>
    %c144 = arith.constant 144 : index
    %c0_6 = arith.constant 0 : index
    %5 = vector.load %arg2[%c144, %c0_6] : memref<272x128xbf16, #tpu.memory_space<vmem>>, vector<128x128xbf16>
    %c0_7 = arith.constant 0 : index
    %c0_8 = arith.constant 0 : index
    %6 = vector.load %arg3[%c0_7, %c0_8] : memref<3x128xf32, #tpu.memory_space<vmem>>, vector<1x128xf32>
    %c1 = arith.constant 1 : index
    %c0_9 = arith.constant 0 : index
    %7 = vector.load %arg3[%c1, %c0_9] : memref<3x128xf32, #tpu.memory_space<vmem>>, vector<1x128xf32>
    %c2 = arith.constant 2 : index
    %c0_10 = arith.constant 0 : index
    %8 = vector.load %arg3[%c2, %c0_10] : memref<3x128xf32, #tpu.memory_space<vmem>>, vector<1x128xf32>
    %cst = arith.constant dense<0.000000e+00> : vector<8x128xf32>
    %9 = tpu.matmul %1, %3, %cst {dimension_numbers = #tpu.dot_dimension_numbers<[1], [0], [0], [1], [0, 0, 1, 1], [], []>} : vector<8x16xbf16>, vector<16x128xbf16>, vector<8x128xf32> -> vector<8x128xf32>
    %10 = vector.broadcast %6 : vector<1x128xf32> to vector<8x128xf32>
    %11 = arith.addf %9, %10 : vector<8x128xf32>
    %12 = arith.truncf %11 : vector<8x128xf32> to vector<8x128xbf16>
    %cst_11 = arith.constant dense<0.000000e+00> : vector<8x128xf32>
    %13 = tpu.matmul %12, %4, %cst_11 {dimension_numbers = #tpu.dot_dimension_numbers<[1], [0], [0], [1], [0, 0, 1, 1], [], []>} : vector<8x128xbf16>, vector<128x128xbf16>, vector<8x128xf32> -> vector<8x128xf32>
    %14 = vector.broadcast %7 : vector<1x128xf32> to vector<8x128xf32>
    %15 = arith.addf %13, %14 : vector<8x128xf32>
    %cst_12 = arith.constant 0.000000e+00 : f32
    %16 = vector.broadcast %cst_12 : f32 to vector<1x1xf32>
    %17 = arith.truncf %15 : vector<8x128xf32> to vector<8x128xbf16>
    %cst_13 = arith.constant dense<0.000000e+00> : vector<8x128xf32>
    %18 = tpu.matmul %2, %17, %cst_13 {dimension_numbers = #tpu.dot_dimension_numbers<[1], [0], [0], [1], [0, 0, 1, 1], [], []>} : vector<8x8xbf16>, vector<8x128xbf16>, vector<8x128xf32> -> vector<8x128xf32>
    %cst_14 = arith.constant 0.594534874 : f32
    %19 = vector.broadcast %cst_14 : f32 to vector<8x128xf32>
    %20 = arith.mulf %19, %18 : vector<8x128xf32>
    %cst_15 = arith.constant 0.405465096 : f32
    %21 = vector.broadcast %cst_15 : f32 to vector<8x128xf32>
    %22 = arith.mulf %21, %15 : vector<8x128xf32>
    %23 = arith.addf %20, %22 : vector<8x128xf32>
    %24 = arith.mulf %23, %23 : vector<8x128xf32>
    %cst_16 = arith.constant dense<0.000000e+00> : vector<8xf32>
    %25 = vector.multi_reduction <add>, %24, %cst_16 [1] : vector<8x128xf32> to vector<8xf32>
    %26 = vector.shape_cast %25 : vector<8xf32> to vector<8x1xf32>
    %27 = arith.mulf %15, %15 : vector<8x128xf32>
    %cst_17 = arith.constant dense<0.000000e+00> : vector<8xf32>
    %28 = vector.multi_reduction <add>, %27, %cst_17 [1] : vector<8x128xf32> to vector<8xf32>
    %29 = vector.shape_cast %28 : vector<8xf32> to vector<8x1xf32>
    %cst_18 = arith.constant 1.000000e-24 : f32
    %30 = vector.broadcast %cst_18 : f32 to vector<8x1xf32>
    %31 = arith.maximumf %26, %30 : vector<8x1xf32>
    %32 = math.rsqrt %31 : vector<8x1xf32>
    %33 = vector.broadcast %32 : vector<8x1xf32> to vector<8x128xf32>
    %34 = arith.mulf %23, %33 : vector<8x128xf32>
    %cst_19 = arith.constant 1.000000e-24 : f32
    %35 = vector.broadcast %cst_19 : f32 to vector<8x1xf32>
    %36 = arith.maximumf %29, %35 : vector<8x1xf32>
    %37 = math.rsqrt %36 : vector<8x1xf32>
    %38 = vector.broadcast %37 : vector<8x1xf32> to vector<8x128xf32>
    %39 = arith.mulf %15, %38 : vector<8x128xf32>
    %cst_20 = arith.constant dense<0.000000e+00> : vector<8x8xf32>
    %40 = tpu.matmul %34, %34, %cst_20 {dimension_numbers = #tpu.dot_dimension_numbers<[1], [1], [0], [0], [0, 0, 1, 0], [], []>} : vector<8x128xf32>, vector<8x128xf32>, vector<8x8xf32> -> vector<8x8xf32>
    %cst_21 = arith.constant dense<0.000000e+00> : vector<8x8xf32>
    %41 = tpu.matmul %34, %39, %cst_21 {dimension_numbers = #tpu.dot_dimension_numbers<[1], [1], [0], [0], [0, 0, 1, 0], [], []>} : vector<8x128xf32>, vector<8x128xf32>, vector<8x8xf32> -> vector<8x8xf32>
    %42 = arith.mulf %34, %34 : vector<8x128xf32>
    %cst_22 = arith.constant dense<0.000000e+00> : vector<8xf32>
    %43 = vector.multi_reduction <add>, %42, %cst_22 [1] : vector<8x128xf32> to vector<8xf32>
    %44 = vector.shape_cast %43 : vector<8xf32> to vector<8x1xf32>
    %cst_23 = arith.constant 2.000000e+00 : f32
    %45 = vector.broadcast %cst_23 : f32 to vector<8x1xf32>
    %46 = arith.mulf %44, %45 : vector<8x1xf32>
    %47 = math.exp %46 : vector<8x1xf32>
    %48 = arith.mulf %34, %39 : vector<8x128xf32>
    %cst_24 = arith.constant dense<0.000000e+00> : vector<8xf32>
    %49 = vector.multi_reduction <add>, %48, %cst_24 [1] : vector<8x128xf32> to vector<8xf32>
    %50 = vector.shape_cast %49 : vector<8xf32> to vector<8x1xf32>
    %cst_25 = arith.constant 2.000000e+00 : f32
    %51 = vector.broadcast %cst_25 : f32 to vector<8x1xf32>
    %52 = arith.mulf %50, %51 : vector<8x1xf32>
    %53 = math.exp %52 : vector<8x1xf32>
    %cst_26 = arith.constant 2.000000e+00 : f32
    %54 = vector.broadcast %cst_26 : f32 to vector<8x8xf32>
    %55 = arith.mulf %40, %54 : vector<8x8xf32>
    %56 = math.exp %55 : vector<8x8xf32>
    %cst_27 = arith.constant dense<0.000000e+00> : vector<8xf32>
    %57 = vector.multi_reduction <add>, %56, %cst_27 [1] : vector<8x8xf32> to vector<8xf32>
    %58 = vector.shape_cast %57 : vector<8xf32> to vector<8x1xf32>
    %cst_28 = arith.constant 2.000000e+00 : f32
    %59 = vector.broadcast %cst_28 : f32 to vector<8x8xf32>
    %60 = arith.mulf %41, %59 : vector<8x8xf32>
    %61 = math.exp %60 : vector<8x8xf32>
    %cst_29 = arith.constant dense<0.000000e+00> : vector<8xf32>
    %62 = vector.multi_reduction <add>, %61, %cst_29 [1] : vector<8x8xf32> to vector<8xf32>
    %63 = vector.shape_cast %62 : vector<8xf32> to vector<8x1xf32>
    %64 = arith.addf %58, %63 : vector<8x1xf32>
    %65 = arith.subf %64, %47 : vector<8x1xf32>
    %66 = arith.subf %65, %53 : vector<8x1xf32>
    %67 = math.log %66 : vector<8x1xf32>
    %68 = arith.subf %67, %52 : vector<8x1xf32>
    %69 = vector.shape_cast %68 : vector<8x1xf32> to vector<1x8x1xf32>
    %cst_30 = arith.constant dense<0.000000e+00> : vector<1xf32>
    %70 = vector.multi_reduction <add>, %69, %cst_30 [1, 2] : vector<1x8x1xf32> to vector<1xf32>
    %71 = vector.shape_cast %70 : vector<1xf32> to vector<1x1x1xf32>
    %72 = vector.extract %71[0, 0, 0] : f32 from vector<1x1x1xf32>
    %73 = vector.broadcast %72 : f32 to vector<1x1xf32>
    %cst_31 = arith.constant 8.000000e+00 : f32
    %74 = vector.broadcast %cst_31 : f32 to vector<1x1xf32>
    %75 = arith.divf %73, %74 : vector<1x1xf32>
    %76 = arith.addf %16, %75 : vector<1x1xf32>
    %77 = arith.truncf %23 : vector<8x128xf32> to vector<8x128xbf16>
    %cst_32 = arith.constant dense<0.000000e+00> : vector<8x128xf32>
    %78 = tpu.matmul %2, %77, %cst_32 {dimension_numbers = #tpu.dot_dimension_numbers<[1], [0], [0], [1], [0, 0, 1, 1], [], []>} : vector<8x8xbf16>, vector<8x128xbf16>, vector<8x128xf32> -> vector<8x128xf32>
    %cst_33 = arith.constant 0.776856422 : f32
    %79 = vector.broadcast %cst_33 : f32 to vector<8x128xf32>
    %80 = arith.mulf %79, %78 : vector<8x128xf32>
    %cst_34 = arith.constant 0.223143548 : f32
    %81 = vector.broadcast %cst_34 : f32 to vector<8x128xf32>
    %82 = arith.mulf %81, %23 : vector<8x128xf32>
    %83 = arith.addf %80, %82 : vector<8x128xf32>
    %84 = arith.mulf %83, %83 : vector<8x128xf32>
    %cst_35 = arith.constant dense<0.000000e+00> : vector<8xf32>
    %85 = vector.multi_reduction <add>, %84, %cst_35 [1] : vector<8x128xf32> to vector<8xf32>
    %86 = vector.shape_cast %85 : vector<8xf32> to vector<8x1xf32>
    %87 = arith.mulf %23, %23 : vector<8x128xf32>
    %cst_36 = arith.constant dense<0.000000e+00> : vector<8xf32>
    %88 = vector.multi_reduction <add>, %87, %cst_36 [1] : vector<8x128xf32> to vector<8xf32>
    %89 = vector.shape_cast %88 : vector<8xf32> to vector<8x1xf32>
    %cst_37 = arith.constant 1.000000e-24 : f32
    %90 = vector.broadcast %cst_37 : f32 to vector<8x1xf32>
    %91 = arith.maximumf %86, %90 : vector<8x1xf32>
    %92 = math.rsqrt %91 : vector<8x1xf32>
    %93 = vector.broadcast %92 : vector<8x1xf32> to vector<8x128xf32>
    %94 = arith.mulf %83, %93 : vector<8x128xf32>
    %cst_38 = arith.constant 1.000000e-24 : f32
    %95 = vector.broadcast %cst_38 : f32 to vector<8x1xf32>
    %96 = arith.maximumf %89, %95 : vector<8x1xf32>
    %97 = math.rsqrt %96 : vector<8x1xf32>
    %98 = vector.broadcast %97 : vector<8x1xf32> to vector<8x128xf32>
    %99 = arith.mulf %23, %98 : vector<8x128xf32>
    %cst_39 = arith.constant dense<0.000000e+00> : vector<8x8xf32>
    %100 = tpu.matmul %94, %94, %cst_39 {dimension_numbers = #tpu.dot_dimension_numbers<[1], [1], [0], [0], [0, 0, 1, 0], [], []>} : vector<8x128xf32>, vector<8x128xf32>, vector<8x8xf32> -> vector<8x8xf32>
    %cst_40 = arith.constant dense<0.000000e+00> : vector<8x8xf32>
    %101 = tpu.matmul %94, %99, %cst_40 {dimension_numbers = #tpu.dot_dimension_numbers<[1], [1], [0], [0], [0, 0, 1, 0], [], []>} : vector<8x128xf32>, vector<8x128xf32>, vector<8x8xf32> -> vector<8x8xf32>
    %102 = arith.mulf %94, %94 : vector<8x128xf32>
    %cst_41 = arith.constant dense<0.000000e+00> : vector<8xf32>
    %103 = vector.multi_reduction <add>, %102, %cst_41 [1] : vector<8x128xf32> to vector<8xf32>
    %104 = vector.shape_cast %103 : vector<8xf32> to vector<8x1xf32>
    %cst_42 = arith.constant 2.000000e+00 : f32
    %105 = vector.broadcast %cst_42 : f32 to vector<8x1xf32>
    %106 = arith.mulf %104, %105 : vector<8x1xf32>
    %107 = math.exp %106 : vector<8x1xf32>
    %108 = arith.mulf %94, %99 : vector<8x128xf32>
    %cst_43 = arith.constant dense<0.000000e+00> : vector<8xf32>
    %109 = vector.multi_reduction <add>, %108, %cst_43 [1] : vector<8x128xf32> to vector<8xf32>
    %110 = vector.shape_cast %109 : vector<8xf32> to vector<8x1xf32>
    %cst_44 = arith.constant 2.000000e+00 : f32
    %111 = vector.broadcast %cst_44 : f32 to vector<8x1xf32>
    %112 = arith.mulf %110, %111 : vector<8x1xf32>
    %113 = math.exp %112 : vector<8x1xf32>
    %cst_45 = arith.constant 2.000000e+00 : f32
    %114 = vector.broadcast %cst_45 : f32 to vector<8x8xf32>
    %115 = arith.mulf %100, %114 : vector<8x8xf32>
    %116 = math.exp %115 : vector<8x8xf32>
    %cst_46 = arith.constant dense<0.000000e+00> : vector<8xf32>
    %117 = vector.multi_reduction <add>, %116, %cst_46 [1] : vector<8x8xf32> to vector<8xf32>
    %118 = vector.shape_cast %117 : vector<8xf32> to vector<8x1xf32>
    %cst_47 = arith.constant 2.000000e+00 : f32
    %119 = vector.broadcast %cst_47 : f32 to vector<8x8xf32>
    %120 = arith.mulf %101, %119 : vector<8x8xf32>
    %121 = math.exp %120 : vector<8x8xf32>
    %cst_48 = arith.constant dense<0.000000e+00> : vector<8xf32>
    %122 = vector.multi_reduction <add>, %121, %cst_48 [1] : vector<8x8xf32> to vector<8xf32>
    %123 = vector.shape_cast %122 : vector<8xf32> to vector<8x1xf32>
    %124 = arith.addf %118, %123 : vector<8x1xf32>
    %125 = arith.subf %124, %107 : vector<8x1xf32>
    %126 = arith.subf %125, %113 : vector<8x1xf32>
    %127 = math.log %126 : vector<8x1xf32>
    %128 = arith.subf %127, %112 : vector<8x1xf32>
    %129 = vector.shape_cast %128 : vector<8x1xf32> to vector<1x8x1xf32>
    %cst_49 = arith.constant dense<0.000000e+00> : vector<1xf32>
    %130 = vector.multi_reduction <add>, %129, %cst_49 [1, 2] : vector<1x8x1xf32> to vector<1xf32>
    %131 = vector.shape_cast %130 : vector<1xf32> to vector<1x1x1xf32>
    %132 = vector.extract %131[0, 0, 0] : f32 from vector<1x1x1xf32>
    %133 = vector.broadcast %132 : f32 to vector<1x1xf32>
    %cst_50 = arith.constant 8.000000e+00 : f32
    %134 = vector.broadcast %cst_50 : f32 to vector<1x1xf32>
    %135 = arith.divf %133, %134 : vector<1x1xf32>
    %136 = arith.addf %76, %135 : vector<1x1xf32>
    %137 = arith.truncf %83 : vector<8x128xf32> to vector<8x128xbf16>
    %cst_51 = arith.constant dense<0.000000e+00> : vector<8x128xf32>
    %138 = tpu.matmul %137, %5, %cst_51 {dimension_numbers = #tpu.dot_dimension_numbers<[1], [0], [0], [1], [0, 0, 1, 1], [], []>} : vector<8x128xbf16>, vector<128x128xbf16>, vector<8x128xf32> -> vector<8x128xf32>
    %139 = vector.broadcast %8 : vector<1x128xf32> to vector<8x128xf32>
    %140 = arith.addf %138, %139 : vector<8x128xf32>
    %cst_52 = arith.constant dense<0xFF800000> : vector<8xf32>
    %141 = vector.multi_reduction <maximumf>, %140, %cst_52 [1] : vector<8x128xf32> to vector<8xf32>
    %142 = vector.shape_cast %141 : vector<8xf32> to vector<8x1xf32>
    %143 = vector.broadcast %142 : vector<8x1xf32> to vector<8x128xf32>
    %144 = arith.subf %140, %143 : vector<8x128xf32>
    %145 = math.exp %144 : vector<8x128xf32>
    %cst_53 = arith.constant dense<0.000000e+00> : vector<8xf32>
    %146 = vector.multi_reduction <add>, %145, %cst_53 [1] : vector<8x128xf32> to vector<8xf32>
    %147 = vector.shape_cast %146 : vector<8xf32> to vector<8x1xf32>
    %148 = math.log %147 : vector<8x1xf32>
    %149 = arith.addf %142, %148 : vector<8x1xf32>
    %150 = vector.broadcast %149 : vector<8x1xf32> to vector<8x128xf32>
    %151 = arith.subf %140, %150 : vector<8x128xf32>
    %c0_54 = arith.constant 0 : index
    %c0_55 = arith.constant 0 : index
    %152 = vector.load %arg4[%c0_54, %c0_55] : memref<8x128xf32, #tpu.memory_space<vmem>>, vector<8x128xf32>
    tpu.vector_store %arg4[%c0_54, %c0_55], %151 {strides = array<i32>} : memref<8x128xf32, #tpu.memory_space<vmem>>, vector<8x128xf32>,
    %153 = vector.extract %136[0, 0] : f32 from vector<1x1xf32>
    %c0_56 = arith.constant 0 : index
    %c0_57 = arith.constant 0 : index
    %154 = memref.load %arg5[%c0_56, %c0_57] : memref<1x1xf32, #tpu.memory_space<smem>>
    memref.store %153, %arg5[%c0_56, %c0_57] : memref<1x1xf32, #tpu.memory_space<smem>>
    return
  }
}

</mosaic_0001>

<llo_original>
// kernel: _lambda_.1
$region0: #{_lambda_.1}
  #allocation0 [shape = 'u32[]', space=smem, size = 0x4, offset = 0x4, fixed_abs, tag = 'smem constant byte address 0x4 - core index']
  #allocation1 [shape = 'u32[72,128]{1,0:T(1,128)}', space=vmem, size = 0x9000, scoped, tag = 'internal scratch']
  %s0 = inlined_call_operand.hbm [shape: f32[8,16], index: 0, kind: input, shape index: {}]
  %s1 = inlined_call_operand.hbm [shape: bf16[8,8], index: 1, kind: input, shape index: {}]
  %s2 = inlined_call_operand.hbm [shape: bf16[272,128], index: 2, kind: input, shape index: {}]
  %s3 = inlined_call_operand.hbm [shape: f32[3,128], index: 3, kind: input, shape index: {}]
  %s4 = inlined_call_operand.vmem [shape: f32[8,128], index: 4, kind: output, shape index: {0}]
  %s5 = inlined_call_operand.hbm [shape: f32[1,1], index: 5, kind: output, shape index: {1}]
  %6 = xla_tuple %s4, %s5
  %s7 = sld [smem:[#allocation0]]
  $region50: #{_lambda_.1} parent=0
    _
  %s9 = ssub.s32 1, %s7
  %s10 = scalar_select 0, %s9, %s7
  $region1: #{_lambda_.1} parent=0
    #allocation2 [shape = 'u8[4096]{0}', space=vmem, size = 0x1000, scoped, tag = 'input window, operand 0, single buffered']
    #allocation3 [shape = 's32[1]{0}', space=sflag, size = 0x4, scoped, tag = 'scoped memory for _lambda_.1']
    #allocation4 [shape = 's32[1]{0}', space=sflag, size = 0x4, scoped, tag = 'scoped memory for _lambda_.1']
    #allocation5 [shape = 'u8[2048]{0}', space=vmem, size = 0x800, scoped, tag = 'input window, operand 1, single buffered']
    #allocation6 [shape = 's32[1]{0}', space=sflag, size = 0x4, scoped, tag = 'scoped memory for _lambda_.1']
    #allocation7 [shape = 'u8[69632]{0}', space=vmem, size = 0x11000, scoped, tag = 'input window, operand 2, single buffered']
    #allocation8 [shape = 'u8[2048]{0}', space=vmem, size = 0x800, scoped, tag = 'input window, operand 3, single buffered']
    #allocation9 [shape = 's32[1]{0}', space=sflag, size = 0x4, scoped, tag = 'scoped memory for _lambda_.1']
    #allocation10 [shape = 'u8[512]{0}', space=smem, size = 0x200, scoped, tag = 'output window, operand 1, single buffered']
    %11 = vsyncpa [#allocation3], 0
    %12 = vsyncpa [#allocation6], 0
    %13 = vsyncpa [#allocation9], 0
    %14 = vsyncpa [#allocation4], 0
    // Predicated region
    $region2: #{_lambda_.1} parent=1 // pred_check
      _
    $region3: #{_lambda_.1} parent=1 // pred_check_branch
      %16 = sbr.rel (0) target = $region5
    $region4: #{_lambda_.1} parent=1 // pred_region
      %18 = vsyncadd [#allocation3], 0
      %s20 = sshll.u32 %s0, 4
      %s21 = int_to_ptr.hbm [resolvable:$true] %s20
      %s22 = sshll.u32 [#allocation2], 4
      %s23 = int_to_ptr.vmem [resolvable:$true] %s22
      %25 = dma.hbm_to_vmem [thread:$0]  %s21, 128, %s23, [#allocation3]
    $region5: #{_lambda_.1} parent=1 // pred_fallthru
      _
    // Predicated region
    $region6: #{_lambda_.1} parent=1 // pred_check
      _
    $region7: #{_lambda_.1} parent=1 // pred_check_branch
      %27 = sbr.rel (0) target = $region9
    $region8: #{_lambda_.1} parent=1 // pred_region
      %29 = vsyncadd [#allocation6], 0
      %s31 = sshll.u32 %s1, 4
      %s32 = int_to_ptr.hbm [resolvable:$true] %s31
      %s33 = sshll.u32 [#allocation5], 4
      %s34 = int_to_ptr.vmem [resolvable:$true] %s33
      %36 = dma.hbm_to_vmem [thread:$0]  %s32, 64, %s34, [#allocation6]
    $region9: #{_lambda_.1} parent=1 // pred_fallthru
      _
    // Predicated region
    $region10: #{_lambda_.1} parent=1 // pred_check
      _
    $region11: #{_lambda_.1} parent=1 // pred_check_branch
      %38 = sbr.rel (0) target = $region13
    $region12: #{_lambda_.1} parent=1 // pred_region
      %40 = vsyncadd [#allocation6], 0
      %s41 = sshll.u32 %s2, 4
      %s42 = int_to_ptr.hbm [resolvable:$true] %s41
      %s43 = sshll.u32 [#allocation7], 4
      %s44 = int_to_ptr.vmem [resolvable:$true] %s43
      %49 = dma.hbm_to_vmem [thread:$0]  %s42, 2176, %s44, [#allocation6], 64, 64, 4
    $region13: #{_lambda_.1} parent=1 // pred_fallthru
      _
    // Predicated region
    $region14: #{_lambda_.1} parent=1 // pred_check
      _
    $region15: #{_lambda_.1} parent=1 // pred_check_branch
      %51 = sbr.rel (0) target = $region17
    $region16: #{_lambda_.1} parent=1 // pred_region
      %53 = vsyncadd [#allocation9], 0
      %s55 = sshll.u32 %s3, 4
      %s56 = int_to_ptr.hbm [resolvable:$true] %s55
      %s57 = sshll.u32 [#allocation8], 4
      %s58 = int_to_ptr.vmem [resolvable:$true] %s57
      %60 = dma.hbm_to_vmem [thread:$0]  %s56, 64, %s58, [#allocation9]
    $region17: #{_lambda_.1} parent=1 // pred_fallthru
      _
    // Predicated region
    $region18: #{_lambda_.1} parent=1 // pred_check
      _
    $region19: #{_lambda_.1} parent=1 // pred_check_branch
      %62 = sbr.rel (0) target = $region21
    $region20: #{_lambda_.1} parent=1 // pred_region
      %64 = dma.done [#allocation3], 128
    $region21: #{_lambda_.1} parent=1 // pred_fallthru
      _
    // Predicated region
    $region22: #{_lambda_.1} parent=1 // pred_check
      _
    $region23: #{_lambda_.1} parent=1 // pred_check_branch
      %66 = sbr.rel (0) target = $region25
    $region24: #{_lambda_.1} parent=1 // pred_region
      %68 = dma.done [#allocation6], 64
    $region25: #{_lambda_.1} parent=1 // pred_fallthru
      _
    // Predicated region
    $region26: #{_lambda_.1} parent=1 // pred_check
      _
    $region27: #{_lambda_.1} parent=1 // pred_check_branch
      %70 = sbr.rel (0) target = $region29
    $region28: #{_lambda_.1} parent=1 // pred_region
      %72 = dma.done [#allocation6], 2176
    $region29: #{_lambda_.1} parent=1 // pred_fallthru
      _
    // Predicated region
    $region30: #{_lambda_.1} parent=1 // pred_check
      _
    $region31: #{_lambda_.1} parent=1 // pred_check_branch
      %74 = sbr.rel (0) target = $region33
    $region32: #{_lambda_.1} parent=1 // pred_region
      %76 = dma.done [#allocation9], 64
    $region33: #{_lambda_.1} parent=1 // pred_fallthru
      _
    %v78 = vld [vmem:[#allocation2] sm:$0xff]
    %v79 = vpack.c.bf16 %v78, %v78
    %v80 = vld [vmem:[#allocation5] sm:$0xf]
    %v81 = vld [vmem:[#allocation7] sm:$0xf]
    %v82 = vld [vmem:[#allocation7 + $0x4] sm:$0xf]
    %v83 = vld [vmem:[#allocation7 + $0x8] sm:$0xf]
    %v84 = vld [vmem:[#allocation7 + $0xc] sm:$0xf]
    %v85 = vld [vmem:[#allocation7 + $0x10] sm:$0xf]
    %v86 = vld [vmem:[#allocation7 + $0x14] sm:$0xf]
    %v87 = vld [vmem:[#allocation7 + $0x18] sm:$0xf]
    %v88 = vld [vmem:[#allocation7 + $0x1c] sm:$0xf]
    %v89 = vld [vmem:[#allocation7 + $0x20] sm:$0xf]
    %v90 = vld [vmem:[#allocation7 + $0x24] sm:$0xf]
    %v91 = vld [vmem:[#allocation7 + $0x28] sm:$0xf]
    %v92 = vld [vmem:[#allocation7 + $0x2c] sm:$0xf]
    %v93 = vld [vmem:[#allocation7 + $0x30] sm:$0xf]
    %v94 = vld [vmem:[#allocation7 + $0x34] sm:$0xf]
    %v95 = vld [vmem:[#allocation7 + $0x38] sm:$0xf]
    %v96 = vld [vmem:[#allocation7 + $0x3c] sm:$0xf]
    %v97 = vld [vmem:[#allocation7 + $0x40] sm:$0xf]
    %v98 = vld [vmem:[#allocation7 + $0x44] sm:$0xf]
    %v99 = vld [vmem:[#allocation7 + $0x48] sm:$0xf]
    %v100 = vld [vmem:[#allocation7 + $0x4c] sm:$0xf]
    %v101 = vld [vmem:[#allocation7 + $0x50] sm:$0xf]
    %v102 = vld [vmem:[#allocation7 + $0x54] sm:$0xf]
    %v103 = vld [vmem:[#allocation7 + $0x58] sm:$0xf]
    %v104 = vld [vmem:[#allocation7 + $0x5c] sm:$0xf]
    %v105 = vld [vmem:[#allocation7 + $0x60] sm:$0xf]
    %v106 = vld [vmem:[#allocation7 + $0x64] sm:$0xf]
    %v107 = vld [vmem:[#allocation7 + $0x68] sm:$0xf]
    %v108 = vld [vmem:[#allocation7 + $0x6c] sm:$0xf]
    %v109 = vld [vmem:[#allocation7 + $0x70] sm:$0xf]
    %v110 = vld [vmem:[#allocation7 + $0x74] sm:$0xf]
    %v111 = vld [vmem:[#allocation7 + $0x78] sm:$0xf]
    %v112 = vld [vmem:[#allocation7 + $0x7c] sm:$0xf]
    %v113 = vld [vmem:[#allocation7 + $0x80] sm:$0xf]
    %v114 = vld [vmem:[#allocation7 + $0x84] sm:$0xf]
    %v115 = vld [vmem:[#allocation8] sm:$0x1]
    %v116 = vld [vmem:[#allocation8 + $0x1] sm:$0x1]
    %v117 = vld [vmem:[#allocation8 + $0x2] sm:$0x1]
    %v118 = vperm.slane %v115, 0
    %v121 = vunpack.c.l.b16 %v81
    %v122 = vunpack.c.l.b16 %v82
    %v123 = vpack.c.b16 %v122, %v121
    %vm125 = vcmask 130048
    %v127 = vsel %vm125, %v79, 0
    %129 = vmatpush.bf16.msra.mxu0 0
    %130 = vmatpush.bf16.msra.mxu0 0
    %131 = vmatpush.bf16.msra.mxu0 0
    %132 = vmatpush.bf16.msra.mxu0 0
    %133 = vmatpush.bf16.msra.mxu0 0
    %134 = vmatpush.bf16.msra.mxu0 0
    %135 = vmatpush.bf16.msra.mxu0 0
    %136 = vmatpush.bf16.msra.mxu0 %v123
    %137 = vmatmul.bf16.gmra.mxu0 %v127
    %v138 = vpop.f32.mrf.mxu0
    %v139 = vadd.f32 %v118, %v138
    %v140 = vpop.f32.mrf.mxu0
    %141 = vdwg.mxu0
    %v142 = vpack.c.bf16 %v139, %v139
    %v143 = vperm.slane %v116, 0
    %v160 = vunpack.c.l.b16 %v83
    %v161 = vunpack.c.l.b16 %v84
    %v162 = vunpack.c.l.b16 %v85
    %v163 = vunpack.c.l.b16 %v86
    %v164 = vunpack.c.l.b16 %v87
    %v165 = vunpack.c.l.b16 %v88
    %v166 = vunpack.c.l.b16 %v89
    %v167 = vunpack.c.l.b16 %v90
    %v168 = vunpack.c.l.b16 %v91
    %v169 = vunpack.c.l.b16 %v92
    %v170 = vunpack.c.l.b16 %v93
    %v171 = vunpack.c.l.b16 %v94
    %v172 = vunpack.c.l.b16 %v95
    %v173 = vunpack.c.l.b16 %v96
    %v174 = vunpack.c.l.b16 %v97
    %v175 = vunpack.c.l.b16 %v98
    %v176 = vpack.c.b16 %v161, %v160
    %v177 = vpack.c.b16 %v163, %v162
    %v178 = vpack.c.b16 %v165, %v164
    %v179 = vpack.c.b16 %v167, %v166
    %v180 = vpack.c.b16 %v169, %v168
    %v181 = vpack.c.b16 %v171, %v170
    %v182 = vpack.c.b16 %v173, %v172
    %v183 = vpack.c.b16 %v175, %v174
    %192 = vmatpush.bf16.msra.mxu0 %v183
    %193 = vmatpush.bf16.msra.mxu0 %v182
    %194 = vmatpush.bf16.msra.mxu0 %v181
    %195 = vmatpush.bf16.msra.mxu0 %v180
    %196 = vmatpush.bf16.msra.mxu0 %v179
    %197 = vmatpush.bf16.msra.mxu0 %v178
    %198 = vmatpush.bf16.msra.mxu0 %v177
    %199 = vmatpush.bf16.msra.mxu0 %v176
    %200 = vmatmul.bf16.gmra.mxu0 %v142
    %v201 = vpop.f32.mrf.mxu0
    %v202 = vadd.f32 %v143, %v201
    %v203 = vpop.f32.mrf.mxu0
    %204 = vdwg.mxu0
    %v205 = vpack.c.bf16 %v202, %v202
    %vm206 = vcmask 64512
    %v208 = vsel %vm206, %v80, 0
    %vm210 = vcmask 1043456
    %v212 = vsel %vm210, %v205, 0
    %214 = vmatpush.bf16.msra.mxu0 0
    %215 = vmatpush.bf16.msra.mxu0 0
    %216 = vmatpush.bf16.msra.mxu0 0
    %217 = vmatpush.bf16.msra.mxu0 0
    %218 = vmatpush.bf16.msra.mxu0 0
    %219 = vmatpush.bf16.msra.mxu0 0
    %220 = vmatpush.bf16.msra.mxu0 0
    %221 = vmatpush.bf16.msra.mxu0 %v212
    %222 = vmatmul.bf16.gmra.mxu0 %v208
    %v223 = vpop.f32.mrf.mxu0
    %v224 = vadd.f32 0.0, %v223
    %v225 = vpop.f32.mrf.mxu0
    %226 = vdwg.mxu0
    %v227 = vmul.f32 %v224, 0.5945349
    %v228 = vmul.f32 %v202, 0.4054651
    %v229 = vadd.f32 %v227, %v228
    %v230 = vmul.f32 %v229, %v229
    %231 = vadd.xlane.f32.xlu0 %v230
    %v232 = vpop.xlane.xlu0 %231
    %v233 = vmul.f32 %v202, %v202
    %234 = vadd.xlane.f32.xlu0 %v233
    %v235 = vpop.xlane.xlu0 %234
    %v236 = vmax.f32 %v232, 1e-24
    %v237 = vrsqrt.pop %v236
    %v238 = vmul.f32 %v237, %v236
    %v239 = vmul.f32 %v238, %v237
    %v240 = vmul.f32 0.5, %v239
    %v241 = vsub.f32 1.5, %v240
    %v242 = vmul.f32 %v237, %v241
    %vm243 = vweird.f32 %v236
    %vm244 = vweird.f32 %v237
    %vm245 = vmor %vm243, %vm244
    %v246 = vsel %vm245, %v237, %v242
    %v247 = vmul.f32 %v229, %v246
    %v248 = vmax.f32 %v235, 1e-24
    %v249 = vrsqrt.pop %v248
    %v250 = vmul.f32 %v249, %v248
    %v251 = vmul.f32 %v250, %v249
    %v252 = vmul.f32 0.5, %v251
    %v253 = vsub.f32 1.5, %v252
    %v254 = vmul.f32 %v249, %v253
    %vm255 = vweird.f32 %v248
    %vm256 = vweird.f32 %v249
    %vm257 = vmor %vm255, %vm256
    %v258 = vsel %vm257, %v249, %v254
    %v259 = vmul.f32 %v202, %v258
    %260 = vmatpush.xpose.msra.mxu0 0.0
    %261 = vmatpush.xpose.msra.mxu0 0.0
    %262 = vmatpush.xpose.msra.mxu0 0.0
    %263 = vmatpush.xpose.msra.mxu0 0.0
    %264 = vmatpush.xpose.msra.mxu0 0.0
    %265 = vmatpush.xpose.msra.mxu0 0.0
    %266 = vmatpush.xpose.msra.mxu0 0.0
    %267 = vmatpush.xpose.msra.mxu0 0.0
    %268 = vmatpush.xpose.msra.mxu0 0.0
    %269 = vmatpush.xpose.msra.mxu0 0.0
    %270 = vmatpush.xpose.msra.mxu0 0.0
    %271 = vmatpush.xpose.msra.mxu0 0.0
    %272 = vmatpush.xpose.msra.mxu0 0.0
    %273 = vmatpush.xpose.msra.mxu0 0.0
    %274 = vmatpush.xpose.msra.mxu0 0.0
    %275 = vmatpush.xpose.msra.mxu0 %v247
    %276 = vmatmul.f32.gmra.mxu0 %v247
    %v277 = vpop.f32.mrf.mxu0
    %v278 = vadd.f32 0.0, %v277
    %279 = vdwg.mxu0
    %280 = vmatpush.xpose.msra.mxu0 0.0
    %281 = vmatpush.xpose.msra.mxu0 0.0
    %282 = vmatpush.xpose.msra.mxu0 0.0
    %283 = vmatpush.xpose.msra.mxu0 0.0
    %284 = vmatpush.xpose.msra.mxu0 0.0
    %285 = vmatpush.xpose.msra.mxu0 0.0
    %286 = vmatpush.xpose.msra.mxu0 0.0
    %287 = vmatpush.xpose.msra.mxu0 0.0
    %288 = vmatpush.xpose.msra.mxu0 0.0
    %289 = vmatpush.xpose.msra.mxu0 0.0
    %290 = vmatpush.xpose.msra.mxu0 0.0
    %291 = vmatpush.xpose.msra.mxu0 0.0
    %292 = vmatpush.xpose.msra.mxu0 0.0
    %293 = vmatpush.xpose.msra.mxu0 0.0
    %294 = vmatpush.xpose.msra.mxu0 0.0
    %295 = vmatpush.xpose.msra.mxu0 %v259
    %296 = vmatmul.f32.gmra.mxu0 %v247
    %v297 = vpop.f32.mrf.mxu0
    %v298 = vadd.f32 0.0, %v297
    %299 = vdwg.mxu0
    %v300 = vmul.f32 %v247, %v247
    %301 = vadd.xlane.f32.xlu0 %v300
    %v302 = vpop.xlane.xlu0 %301
    %v303 = vmul.f32 %v302, 2.0
    %v304 = vmul.f32 %v303, 1.442695
    %v305 = vpow.pop %v304
    %v306 = vmul.f32 %v247, %v259
    %307 = vadd.xlane.f32.xlu0 %v306
    %v308 = vpop.xlane.xlu0 %307
    %v309 = vmul.f32 %v308, 2.0
    %v310 = vmul.f32 %v309, 1.442695
    %v311 = vpow.pop %v310
    %v312 = vmul.f32 %v278, 2.0
    %v313 = vmul.f32 %v312, 1.442695
    %v314 = vpow.pop %v313
    %v315 = vsel %vm206, %v314, 0.0
    %316 = vadd.xlane.f32.xlu0 %v315
    %v317 = vpop.xlane.xlu0 %316
    %v318 = vmul.f32 %v298, 2.0
    %v319 = vmul.f32 %v318, 1.442695
    %v320 = vpow.pop %v319
    %v321 = vsel %vm206, %v320, 0.0
    %322 = vadd.xlane.f32.xlu0 %v321
    %v323 = vpop.xlane.xlu0 %322
    %v324 = vadd.f32 %v317, %v323
    %v325 = vsub.f32 %v324, %v305
    %v326 = vsub.f32 %v325, %v311
    %v327 = vlog2.pop %v326
    %v328 = vmul.f32 %v327, 0.6931472
    %v329 = vsub.f32 %v328, %v309
    %vm330 = vcmask 7168
    %v331 = vsel %vm330, %v329, 0.0
    %332 = vadd.xlane.f32.xlu0 %v331
    %v333 = vpop.xlane.xlu0 %332
    %v334 = vrot.slane %v333, 4
    %v335 = vadd.f32 %v333, %v334
    %v336 = vrot.slane %v335, 2
    %v337 = vadd.f32 %v335, %v336
    %v338 = vrot.slane %v337, 1
    %v339 = vadd.f32 %v337, %v338
    %s340 = vtos %v339
    %v341 = vstv %s340
    %v342 = vrcp.pop 8.0
    %v343 = vmul.f32 8.0, %v342
    %v344 = vsub.f32 1.0, %v343
    %v345 = vmul.f32 %v342, %v344
    %v346 = vadd.f32 %v342, %v345
    %vm347 = vweird.f32 %v342
    %v348 = vsel %vm347, %v342, %v346
    %v349 = vmul.f32 %v341, %v348
    %v350 = vadd.f32 %v349, 0.0
    %v351 = vpack.c.bf16 %v229, %v229
    %v353 = vsel %vm210, %v351, 0
    %355 = vmatpush.bf16.msra.mxu0 0
    %356 = vmatpush.bf16.msra.mxu0 0
    %357 = vmatpush.bf16.msra.mxu0 0
    %358 = vmatpush.bf16.msra.mxu0 0
    %359 = vmatpush.bf16.msra.mxu0 0
    %360 = vmatpush.bf16.msra.mxu0 0
    %361 = vmatpush.bf16.msra.mxu0 0
    %362 = vmatpush.bf16.msra.mxu0 %v353
    %363 = vmatmul.bf16.gmra.mxu0 %v208
    %v364 = vpop.f32.mrf.mxu0
    %v365 = vadd.f32 0.0, %v364
    %v366 = vpop.f32.mrf.mxu0
    %367 = vdwg.mxu0
    %v368 = vmul.f32 %v365, 0.7768564
    %v369 = vmul.f32 %v229, 0.22314355
    %v370 = vadd.f32 %v368, %v369
    %v371 = vmul.f32 %v370, %v370
    %372 = vadd.xlane.f32.xlu0 %v371
    %v373 = vpop.xlane.xlu0 %372
    %v374 = vmax.f32 %v373, 1e-24
    %v375 = vrsqrt.pop %v374
    %v376 = vmul.f32 %v375, %v374
    %v377 = vmul.f32 %v376, %v375
    %v378 = vmul.f32 0.5, %v377
    %v379 = vsub.f32 1.5, %v378
    %v380 = vmul.f32 %v375, %v379
    %vm381 = vweird.f32 %v374
    %vm382 = vweird.f32 %v375
    %vm383 = vmor %vm381, %vm382
    %v384 = vsel %vm383, %v375, %v380
    %v385 = vmul.f32 %v370, %v384
    %386 = vmatpush.xpose.msra.mxu0 0.0
    %387 = vmatpush.xpose.msra.mxu0 0.0
    %388 = vmatpush.xpose.msra.mxu0 0.0
    %389 = vmatpush.xpose.msra.mxu0 0.0
    %390 = vmatpush.xpose.msra.mxu0 0.0
    %391 = vmatpush.xpose.msra.mxu0 0.0
    %392 = vmatpush.xpose.msra.mxu0 0.0
    %393 = vmatpush.xpose.msra.mxu0 0.0
    %394 = vmatpush.xpose.msra.mxu0 0.0
    %395 = vmatpush.xpose.msra.mxu0 0.0
    %396 = vmatpush.xpose.msra.mxu0 0.0
    %397 = vmatpush.xpose.msra.mxu0 0.0
    %398 = vmatpush.xpose.msra.mxu0 0.0
    %399 = vmatpush.xpose.msra.mxu0 0.0
    %400 = vmatpush.xpose.msra.mxu0 0.0
    %401 = vmatpush.xpose.msra.mxu0 %v385
    %402 = vmatmul.f32.gmra.mxu0 %v385
    %v403 = vpop.f32.mrf.mxu0
    %v404 = vadd.f32 0.0, %v403
    %405 = vdwg.mxu0
    %406 = vmatpush.xpose.msra.mxu0 0.0
    %407 = vmatpush.xpose.msra.mxu0 0.0
    %408 = vmatpush.xpose.msra.mxu0 0.0
    %409 = vmatpush.xpose.msra.mxu0 0.0
    %410 = vmatpush.xpose.msra.mxu0 0.0
    %411 = vmatpush.xpose.msra.mxu0 0.0
    %412 = vmatpush.xpose.msra.mxu0 0.0
    %413 = vmatpush.xpose.msra.mxu0 0.0
    %414 = vmatpush.xpose.msra.mxu0 0.0
    %415 = vmatpush.xpose.msra.mxu0 0.0
    %416 = vmatpush.xpose.msra.mxu0 0.0
    %417 = vmatpush.xpose.msra.mxu0 0.0
    %418 = vmatpush.xpose.msra.mxu0 0.0
    %419 = vmatpush.xpose.msra.mxu0 0.0
    %420 = vmatpush.xpose.msra.mxu0 0.0
    %421 = vmatpush.xpose.msra.mxu0 %v247
    %422 = vmatmul.f32.gmra.mxu0 %v385
    %v423 = vpop.f32.mrf.mxu0
    %v424 = vadd.f32 0.0, %v423
    %425 = vdwg.mxu0
    %v426 = vmul.f32 %v385, %v385
    %427 = vadd.xlane.f32.xlu0 %v426
    %v428 = vpop.xlane.xlu0 %427
    %v429 = vmul.f32 %v428, 2.0
    %v430 = vmul.f32 %v429, 1.442695
    %v431 = vpow.pop %v430
    %v432 = vmul.f32 %v385, %v247
    %433 = vadd.xlane.f32.xlu0 %v432
    %v434 = vpop.xlane.xlu0 %433
    %v435 = vmul.f32 %v434, 2.0
    %v436 = vmul.f32 %v435, 1.442695
    %v437 = vpow.pop %v436
    %v438 = vmul.f32 %v404, 2.0
    %v439 = vmul.f32 %v438, 1.442695
    %v440 = vpow.pop %v439
    %v441 = vsel %vm206, %v440, 0.0
    %442 = vadd.xlane.f32.xlu0 %v441
    %v443 = vpop.xlane.xlu0 %442
    %v444 = vmul.f32 %v424, 2.0
    %v445 = vmul.f32 %v444, 1.442695
    %v446 = vpow.pop %v445
    %v447 = vsel %vm206, %v446, 0.0
    %448 = vadd.xlane.f32.xlu0 %v447
    %v449 = vpop.xlane.xlu0 %448
    %v450 = vadd.f32 %v443, %v449
    %v451 = vsub.f32 %v450, %v431
    %v452 = vsub.f32 %v451, %v437
    %v453 = vlog2.pop %v452
    %v454 = vmul.f32 %v453, 0.6931472
    %v455 = vsub.f32 %v454, %v435
    %v456 = vsel %vm330, %v455, 0.0
    %457 = vadd.xlane.f32.xlu0 %v456
    %v458 = vpop.xlane.xlu0 %457
    %v459 = vrot.slane %v458, 4
    %v460 = vadd.f32 %v458, %v459
    %v461 = vrot.slane %v460, 2
    %v462 = vadd.f32 %v460, %v461
    %v463 = vrot.slane %v462, 1
    %v464 = vadd.f32 %v462, %v463
    %s465 = vtos %v464
    %v466 = vstv %s465
    %v467 = vmul.f32 %v466, %v348
    %v468 = vadd.f32 %v350, %v467
    %v469 = vpack.c.bf16 %v370, %v370
    %v470 = vperm.slane %v117, 0
    %v487 = vunpack.c.l.b16 %v99
    %v488 = vunpack.c.l.b16 %v100
    %v489 = vunpack.c.l.b16 %v101
    %v490 = vunpack.c.l.b16 %v102
    %v491 = vunpack.c.l.b16 %v103
    %v492 = vunpack.c.l.b16 %v104
    %v493 = vunpack.c.l.b16 %v105
    %v494 = vunpack.c.l.b16 %v106
    %v495 = vunpack.c.l.b16 %v107
    %v496 = vunpack.c.l.b16 %v108
    %v497 = vunpack.c.l.b16 %v109
    %v498 = vunpack.c.l.b16 %v110
    %v499 = vunpack.c.l.b16 %v111
    %v500 = vunpack.c.l.b16 %v112
    %v501 = vunpack.c.l.b16 %v113
    %v502 = vunpack.c.l.b16 %v114
    %v503 = vpack.c.b16 %v488, %v487
    %v504 = vpack.c.b16 %v490, %v489
    %v505 = vpack.c.b16 %v492, %v491
    %v506 = vpack.c.b16 %v494, %v493
    %v507 = vpack.c.b16 %v496, %v495
    %v508 = vpack.c.b16 %v498, %v497
    %v509 = vpack.c.b16 %v500, %v499
    %v510 = vpack.c.b16 %v502, %v501
    %519 = vmatpush.bf16.msra.mxu0 %v510
    %520 = vmatpush.bf16.msra.mxu0 %v509
    %521 = vmatpush.bf16.msra.mxu0 %v508
    %522 = vmatpush.bf16.msra.mxu0 %v507
    %523 = vmatpush.bf16.msra.mxu0 %v506
    %524 = vmatpush.bf16.msra.mxu0 %v505
    %525 = vmatpush.bf16.msra.mxu0 %v504
    %526 = vmatpush.bf16.msra.mxu0 %v503
    %527 = vmatmul.bf16.gmra.mxu0 %v469
    %v528 = vpop.f32.mrf.mxu0
    %v529 = vadd.f32 %v470, %v528
    %v530 = vpop.f32.mrf.mxu0
    %531 = vdwg.mxu0
    %532 = vmax.xlane.f32.xlu0 %v529
    %v533 = vpop.xlane.xlu0 %532
    %v534 = vsub.f32 %v529, %v533
    %v535 = vmul.f32 %v534, 1.442695
    %v536 = vpow.pop %v535
    %537 = vadd.xlane.f32.xlu0 %v536
    %v538 = vpop.xlane.xlu0 %537
    %v539 = vlog2.pop %v538
    %v540 = vmul.f32 %v539, 0.6931472
    %v541 = vadd.f32 %v533, %v540
    %v542 = vsub.f32 %v529, %v541
    %543 = vst [vmem:[%s4] sm:$0xff] %v542
    %s544 = vtos %v468
    %s545 = scalar_lea.smem [#allocation10], 0
    %546 = sst [smem:[%s545]] %s544
    // Predicated region
    $region34: #{_lambda_.1} parent=1 // pred_check
      _
    $region35: #{_lambda_.1} parent=1 // pred_check_branch
      %548 = sbr.rel (0) target = $region37
    $region36: #{_lambda_.1} parent=1 // pred_region
      _
    $region37: #{_lambda_.1} parent=1 // pred_fallthru
      _
    // Predicated region
    $region38: #{_lambda_.1} parent=1 // pred_check
      _
    $region39: #{_lambda_.1} parent=1 // pred_check_branch
      %550 = sbr.rel (0) target = $region41
    $region40: #{_lambda_.1} parent=1 // pred_region
      %552 = vsyncadd [#allocation4], 0
      %s554 = sshll.u32 %s5, 4
      %s555 = int_to_ptr.hbm [resolvable:$true] %s554
      %557 = dma.smem_to_hbm [#allocation10], 16, %s555, [#allocation4]
    $region41: #{_lambda_.1} parent=1 // pred_fallthru
      _
    // Predicated region
    $region42: #{_lambda_.1} parent=1 // pred_check
      _
    $region43: #{_lambda_.1} parent=1 // pred_check_branch
      %559 = sbr.rel (0) target = $region45
    $region44: #{_lambda_.1} parent=1 // pred_region
      _
    $region45: #{_lambda_.1} parent=1 // pred_fallthru
      _
    // Predicated region
    $region46: #{_lambda_.1} parent=1 // pred_check
      _
    $region47: #{_lambda_.1} parent=1 // pred_check_branch
      %561 = sbr.rel (0) target = $region49
    $region48: #{_lambda_.1} parent=1 // pred_region
      %563 = dma.done [#allocation4], 16
    $region49: #{_lambda_.1} parent=1 // pred_fallthru
      _
    %564 = sfence
    %565 = vsyncpa [#allocation3], 1
    %566 = vsyncpa [#allocation6], 1
    %567 = vsyncpa [#allocation9], 1
    %568 = vsyncpa [#allocation4], 1

</llo_original>
